<compile_context>
chip_gen: v5e
topology: v5e:2x2
jax: 0.10.0
libtpu: 0.0.40
codegen_flags: <defaults>
</compile_context>

<pallas_src>
import jax
import jax.numpy as jnp
from jax.experimental import pallas as pl
from jax.experimental.pallas import tpu as pltpu

EPS = 1e-6  # torch_uncertainty adds a small epsilon after softplus for positivity


def _softplus(x):
    # Numerically stable softplus: max(x, 0) + log1p(exp(-|x|))
    return jnp.maximum(x, 0.0) + jnp.log1p(jnp.exp(-jnp.abs(x)))


def _round_up(n, m):
    return ((n + m - 1) // m) * m


def dist_mlp_kernel(x_ref, w1_ref, b1_ref, w2_ref, b2_ref, out_ref):
    x = x_ref[...]                                                    # (TB, in)
    # fc1 + ReLU  (MXU + VPU)
    h = jnp.dot(x, w1_ref[...], preferred_element_type=jnp.float32) + b1_ref[...]
    h = jnp.maximum(h, 0.0)                                           # (TB, hidden_pad)
    # fused loc|scale head: one matmul, lane-dense (TB, 2*out) result
    y = jnp.dot(h, w2_ref[...], preferred_element_type=jnp.float32) + b2_ref[...]
    out_f = out_ref.shape[-1] // 2
    lane = jax.lax.broadcasted_iota(jnp.int32, y.shape, 1)
    # columns [0, out_f) -> loc (identity); columns [out_f, 2*out_f) -> softplus + eps
    out_ref[...] = jnp.where(lane >= out_f, _softplus(y) + EPS, y).astype(out_ref.dtype)


def dist_mlp(x, w1, b1, wloc, bloc, wscale, bscale, *, tb_max=8192):
    """x: (B, in_features) f32; weights pre-transposed to (in, out)."""
    B, in_features = x.shape
    hidden = w1.shape[1]
    out_features = wloc.shape[1]
    two_out = 2 * out_features

    # ---- fuse the two heads into one lane-dense matmul ----
    w2 = jnp.concatenate([wloc, wscale], axis=1)        # (hidden, 2*out)
    b2 = jnp.concatenate([bloc, bscale], axis=1)        # (1, 2*out)

    # ---- pad hidden (lane dim of h / K of head matmul) to a multiple of 128 ----
    # Zero-padded W1 columns / b1 entries give relu(0)=0 activations, and the
    # corresponding W2 rows are zero, so the math is unchanged; tiles become
    # cleanly (8,128)-aligned.
    hidden_pad = _round_up(hidden, 128)
    if hidden_pad != hidden:
        pad_h = hidden_pad - hidden
        w1 = jnp.pad(w1, ((0, 0), (0, pad_h)))
        b1 = jnp.pad(b1, ((0, 0), (0, pad_h)))
        w2 = jnp.pad(w2, ((0, pad_h), (0, 0)))

    # ---- batch tiling: large tiles to amortize per-step overhead ----
    B_pad = _round_up(max(B, 8), 8)
    TB = min(tb_max, B_pad)
    # Keep >= 2 grid steps whenever possible so v7x's two TensorCores both get
    # work under the "parallel" batch axis (no-op cost on v5e/v6e).
    if B_pad // TB < 2 and B_pad >= 16:
        TB = _round_up(pl.cdiv(B_pad, 2), 8)
    B_pad = _round_up(B_pad, TB)          # every block full; padded rows sliced off below
    if B_pad != B:
        x = jnp.pad(x, ((0, B_pad - B), (0, 0)))
    grid = (B_pad // TB,)

    # ---- VMEM budget for this tile (double-buffered x/out + weights + f32 h/y) ----
    vmem_bytes = 4 * (2 * TB * in_features            # x, double-buffered
                      + 2 * TB * two_out              # out, double-buffered
                      + in_features * hidden_pad + hidden_pad
                      + hidden_pad * two_out + two_out
                      + 2 * TB * hidden_pad)          # h and y intermediates (f32)
    # >= 32 MiB (v5e scoped default is only 16 MiB), <= 48 MiB (v7x has 64 MiB physical).
    vmem_limit = min(max(vmem_bytes + (8 << 20), 32 << 20), 48 << 20)

    cost = pl.CostEstimate(
        flops=2 * B_pad * (in_features * hidden_pad + hidden_pad * two_out),
        transcendentals=2 * B_pad * two_out,          # exp + log1p per output lane
        bytes_accessed=4 * (B_pad * (in_features + two_out)
                            + in_features * hidden_pad + hidden_pad
                            + hidden_pad * two_out + two_out),
    )

    out = pl.pallas_call(
        dist_mlp_kernel,
        out_shape=jax.ShapeDtypeStruct((B_pad, two_out), jnp.float32),
        grid=grid,
        in_specs=[
            pl.BlockSpec((TB, in_features), lambda i: (i, 0)),          # x: batch-tiled
            pl.BlockSpec((in_features, hidden_pad), lambda i: (0, 0)),  # weights stay VMEM-resident
            pl.BlockSpec((1, hidden_pad), lambda i: (0, 0)),
            pl.BlockSpec((hidden_pad, two_out), lambda i: (0, 0)),
            pl.BlockSpec((1, two_out), lambda i: (0, 0)),
        ],
        out_specs=pl.BlockSpec((TB, two_out), lambda i: (i, 0)),
        compiler_params=pltpu.CompilerParams(
            dimension_semantics=("parallel",),            # megacore-shard batch axis (v7x)
            vmem_limit_bytes=vmem_limit,
        ),
        cost_estimate=cost,
    )(x, w1, b1, w2, b2)

    loc = out[:B, :out_features]
    scale = out[:B, out_features:]
    return loc, scale


def init_params(key, in_features, hidden, out_features):
    """Deterministic PyTorch-Linear-style (uniform) init; stored transposed (in, out)."""
    ks = jax.random.split(key, 6)

    def lin(kw, kb, fan_in, fan_out):
        bound = 1.0 / jnp.sqrt(fan_in)
        w = jax.random.uniform(kw, (fan_in, fan_out), jnp.float32, -bound, bound)
        b = jax.random.uniform(kb, (1, fan_out), jnp.float32, -bound, bound)
        return w, b

    w1, b1 = lin(ks[0], ks[1], in_features, hidden)
    wloc, bloc = lin(ks[2], ks[3], hidden, out_features)
    wscale, bscale = lin(ks[4], ks[5], hidden, out_features)
    return w1, b1, wloc, bloc, wscale, bscale


def _reference(x, params):
    w1, b1, wloc, bloc, wscale, bscale = params
    h = jnp.maximum(x @ w1 + b1, 0.0)
    loc = h @ wloc + bloc
    scale = jax.nn.softplus(h @ wscale + bscale) + EPS
    return loc, scale


if __name__ == "__main__":
    key = jax.random.PRNGKey(0)
    in_features, hidden, out_features = 16, 50, 4

    kx1, kx2, kp = jax.random.split(key, 3)
    params = init_params(kp, in_features, hidden, out_features)

    ok = True
    # B=8: single-block path; B=37: batch padding + >=2 grid steps (both TCs on v7x)
    for kx, B in ((kx1, 8), (kx2, 37)):
        x = jax.random.normal(kx, (B, in_features), jnp.float32)
        loc, scale = dist_mlp(x, *params)
        jax.block_until_ready((loc, scale))

        loc_ref, scale_ref = _reference(x, params)
        ok &= bool(jnp.allclose(loc, loc_ref, atol=1e-5))
        ok &= bool(jnp.allclose(scale, scale_ref, atol=1e-5))
        ok &= bool(jnp.all(scale > 0))

    assert ok, "mismatch vs. plain-JAX reference"
    print("KERNEL_OK")
</pallas_src>

<mosaic_0001>
module attributes {stable_mosaic.version = 11 : i64} {
  func.func @dist_mlp_kernel(%arg0: i32, %arg1: memref<8x16xf32, #tpu.memory_space<vmem>>, %arg2: memref<16x128xf32, #tpu.memory_space<vmem>>, %arg3: memref<1x128xf32, #tpu.memory_space<vmem>>, %arg4: memref<128x8xf32, #tpu.memory_space<vmem>>, %arg5: memref<1x8xf32, #tpu.memory_space<vmem>>, %arg6: memref<8x8xf32, #tpu.memory_space<vmem>>) attributes {dimension_semantics = [#tpu.dimension_semantics<parallel>], iteration_bounds = array<i64: 1>, scalar_prefetch = 0 : i64, scratch_operands = 0 : i64, tpu.core_type = #tpu.core_type<tc>, window_params = [{transform_indices = @transform_0, window_bounds = array<i64: 8, 16>}, {pipeline_mode = #tpu.pipeline_mode<synchronous>, transform_indices = @transform_1, window_bounds = array<i64: 16, 128>}, {pipeline_mode = #tpu.pipeline_mode<synchronous>, transform_indices = @transform_2, window_bounds = array<i64: 1, 128>}, {pipeline_mode = #tpu.pipeline_mode<synchronous>, transform_indices = @transform_3, window_bounds = array<i64: 128, 8>}, {pipeline_mode = #tpu.pipeline_mode<synchronous>, transform_indices = @transform_4, window_bounds = array<i64: 1, 8>}, {transform_indices = @transform_5, window_bounds = array<i64: 8, 8>}]} {
    %c0 = arith.constant 0 : index
    %c0_0 = arith.constant 0 : index
    %0 = vector.load %arg1[%c0, %c0_0] : memref<8x16xf32, #tpu.memory_space<vmem>>, vector<8x16xf32>
    %c0_1 = arith.constant 0 : index
    %c0_2 = arith.constant 0 : index
    %1 = vector.load %arg2[%c0_1, %c0_2] : memref<16x128xf32, #tpu.memory_space<vmem>>, vector<16x128xf32>
    %cst = arith.constant dense<0.000000e+00> : vector<8x128xf32>
    %2 = tpu.matmul %0, %1, %cst {dimension_numbers = #tpu.dot_dimension_numbers<[1], [0], [0], [1], [0, 0, 1, 1], [], []>} : vector<8x16xf32>, vector<16x128xf32>, vector<8x128xf32> -> vector<8x128xf32>
    %c0_3 = arith.constant 0 : index
    %c0_4 = arith.constant 0 : index
    %3 = vector.load %arg3[%c0_3, %c0_4] : memref<1x128xf32, #tpu.memory_space<vmem>>, vector<1x128xf32>
    %4 = vector.broadcast %3 : vector<1x128xf32> to vector<8x128xf32>
    %5 = arith.addf %2, %4 : vector<8x128xf32>
    %cst_5 = arith.constant 0.000000e+00 : f32
    %6 = vector.broadcast %cst_5 : f32 to vector<8x128xf32>
    %7 = arith.maximumf %5, %6 : vector<8x128xf32>
    %c0_6 = arith.constant 0 : index
    %c0_7 = arith.constant 0 : index
    %8 = vector.load %arg4[%c0_6, %c0_7] : memref<128x8xf32, #tpu.memory_space<vmem>>, vector<128x8xf32>
    %cst_8 = arith.constant dense<0.000000e+00> : vector<8x8xf32>
    %9 = tpu.matmul %7, %8, %cst_8 {dimension_numbers = #tpu.dot_dimension_numbers<[1], [0], [0], [1], [0, 0, 1, 1], [], []>} : vector<8x128xf32>, vector<128x8xf32>, vector<8x8xf32> -> vector<8x8xf32>
    %c0_9 = arith.constant 0 : index
    %c0_10 = arith.constant 0 : index
    %10 = vector.load %arg5[%c0_9, %c0_10] : memref<1x8xf32, #tpu.memory_space<vmem>>, vector<1x8xf32>
    %11 = vector.broadcast %10 : vector<1x8xf32> to vector<8x8xf32>
    %12 = arith.addf %9, %11 : vector<8x8xf32>
    %13 = tpu.iota {dimensions = array<i32: 1>} : vector<8x8xi32>
    %c4_i32 = arith.constant 4 : i32
    %14 = vector.broadcast %c4_i32 : i32 to vector<8x8xi32>
    %15 = arith.cmpi sge, %13, %14 : vector<8x8xi32>
    %cst_11 = arith.constant 0.000000e+00 : f32
    %16 = vector.broadcast %cst_11 : f32 to vector<8x8xf32>
    %17 = arith.maximumf %12, %16 : vector<8x8xf32>
    %18 = math.absf %12 : vector<8x8xf32>
    %cst_12 = arith.constant 0.000000e+00 : f32
    %19 = vector.broadcast %cst_12 : f32 to vector<8x8xf32>
    %20 = arith.subf %19, %18 : vector<8x8xf32>
    %21 = math.exp %20 : vector<8x8xf32>
    %22 = math.log1p %21 : vector<8x8xf32>
    %23 = arith.addf %17, %22 : vector<8x8xf32>
    %cst_13 = arith.constant 9.99999997E-7 : f32
    %24 = vector.broadcast %cst_13 : f32 to vector<8x8xf32>
    %25 = arith.addf %23, %24 : vector<8x8xf32>
    %26 = arith.select %15, %25, %12 : vector<8x8xi1>, vector<8x8xf32>
    %c0_14 = arith.constant 0 : index
    %c0_15 = arith.constant 0 : index
    %27 = vector.load %arg6[%c0_14, %c0_15] : memref<8x8xf32, #tpu.memory_space<vmem>>, vector<8x8xf32>
    tpu.vector_store %arg6[%c0_14, %c0_15], %26 {strides = array<i32>} : memref<8x8xf32, #tpu.memory_space<vmem>>, vector<8x8xf32>,
    return
  }
  func.func @transform_0(%arg0: i32) -> (i32, i32) {
    %c0_i32 = arith.constant 0 : i32
    %c0_i32_0 = arith.constant 0 : i32
    return %arg0, %c0_i32 : i32, i32
  }
  func.func @transform_1(%arg0: i32) -> (i32, i32) {
    %c0_i32 = arith.constant 0 : i32
    %c0_i32_0 = arith.constant 0 : i32
    %c0_i32_1 = arith.constant 0 : i32
    return %c0_i32, %c0_i32_0 : i32, i32
  }
  func.func @transform_2(%arg0: i32) -> (i32, i32) {
    %c0_i32 = arith.constant 0 : i32
    %c0_i32_0 = arith.constant 0 : i32
    %c0_i32_1 = arith.constant 0 : i32
    return %c0_i32, %c0_i32_0 : i32, i32
  }
  func.func @transform_3(%arg0: i32) -> (i32, i32) {
    %c0_i32 = arith.constant 0 : i32
    %c0_i32_0 = arith.constant 0 : i32
    %c0_i32_1 = arith.constant 0 : i32
    return %c0_i32, %c0_i32_0 : i32, i32
  }
  func.func @transform_4(%arg0: i32) -> (i32, i32) {
    %c0_i32 = arith.constant 0 : i32
    %c0_i32_0 = arith.constant 0 : i32
    %c0_i32_1 = arith.constant 0 : i32
    return %c0_i32, %c0_i32_0 : i32, i32
  }
  func.func @transform_5(%arg0: i32) -> (i32, i32) {
    %c0_i32 = arith.constant 0 : i32
    %c0_i32_0 = arith.constant 0 : i32
    return %arg0, %c0_i32 : i32, i32
  }
}

</mosaic_0001>

<llo_original>
// kernel: tpu_custom_call.1
$region0: #{tpu_custom_call.1}
  #allocation0 [shape = 'u32[]', space=smem, size = 0x4, offset = 0x4, fixed_abs, tag = 'smem constant byte address 0x4 - core index']
  #allocation1 [shape = 'u32[72,128]{1,0:T(1,128)}', space=vmem, size = 0x9000, scoped, tag = 'internal scratch']
  %s0 = inlined_call_operand.vmem [shape: f32[8,16], index: 0, kind: input, shape index: {}]
  %s1 = inlined_call_operand.vmem [shape: f32[16,128], index: 1, kind: input, shape index: {}]
  %s2 = inlined_call_operand.vmem [shape: f32[1,128], index: 2, kind: input, shape index: {}]
  %s3 = inlined_call_operand.vmem [shape: f32[128,8], index: 3, kind: input, shape index: {}]
  %s4 = inlined_call_operand.vmem [shape: f32[1,8], index: 4, kind: input, shape index: {}]
  %s5 = inlined_call_operand.hbm [shape: f32[8,8], index: 5, kind: output, shape index: {}]
  %s6 = sld [smem:[#allocation0]]
  $region30: #{tpu_custom_call.1} parent=0
    _
  %s8 = ssub.s32 1, %s6
  %s9 = scalar_select 0, %s8, %s6
  $region1: #{tpu_custom_call.1} parent=0
    #allocation2 [shape = 'u8[4096]{0}', space=vmem, size = 0x1000, scoped, tag = 'output window, operand 0, single buffered']
    #allocation3 [shape = 's32[1]{0}', space=sflag, size = 0x4, scoped, tag = 'scoped memory for tpu_custom_call.1']
    %10 = vsyncpa [#allocation3], 0
    // Predicated region
    $region2: #{tpu_custom_call.1} parent=1 // pred_check
      _
    $region3: #{tpu_custom_call.1} parent=1 // pred_check_branch
      %12 = sbr.rel (0) target = $region5
    $region4: #{tpu_custom_call.1} parent=1 // pred_region
      _
    $region5: #{tpu_custom_call.1} parent=1 // pred_fallthru
      _
    // Predicated region
    $region6: #{tpu_custom_call.1} parent=1 // pred_check
      _
    $region7: #{tpu_custom_call.1} parent=1 // pred_check_branch
      %14 = sbr.rel (0) target = $region9
    $region8: #{tpu_custom_call.1} parent=1 // pred_region
      _
    $region9: #{tpu_custom_call.1} parent=1 // pred_fallthru
      _
    // Predicated region
    $region10: #{tpu_custom_call.1} parent=1 // pred_check
      _
    $region11: #{tpu_custom_call.1} parent=1 // pred_check_branch
      %16 = sbr.rel (0) target = $region13
    $region12: #{tpu_custom_call.1} parent=1 // pred_region
      _
    $region13: #{tpu_custom_call.1} parent=1 // pred_fallthru
      _
    // Predicated region
    $region14: #{tpu_custom_call.1} parent=1 // pred_check
      _
    $region15: #{tpu_custom_call.1} parent=1 // pred_check_branch
      %18 = sbr.rel (0) target = $region17
    $region16: #{tpu_custom_call.1} parent=1 // pred_region
      _
    $region17: #{tpu_custom_call.1} parent=1 // pred_fallthru
      _
    // Predicated region
    $region18: #{tpu_custom_call.1} parent=1 // pred_check
      _
    $region19: #{tpu_custom_call.1} parent=1 // pred_check_branch
      %20 = sbr.rel (0) target = $region21
    $region20: #{tpu_custom_call.1} parent=1 // pred_region
      _
    $region21: #{tpu_custom_call.1} parent=1 // pred_fallthru
      _
    %v21 = vld [vmem:[%s0] sm:$0xff]
    %v22 = vld [vmem:[%s1] sm:$0xff]
    %v23 = vld [vmem:[%s1 + $0x8] sm:$0xff]
    %v24 = vld [vmem:[%s2] sm:$0x1]
    %v26 = vperm.slane %v24, 0
    %vm28 = vcmask 130048
    %v30 = vsel %vm28, %v21, 0
    %32 = vmatpush.msra.mxu0 0.0
    %33 = vmatpush.msra.mxu0 0.0
    %34 = vmatpush.msra.mxu0 0.0
    %35 = vmatpush.msra.mxu0 0.0
    %36 = vmatpush.msra.mxu0 0.0
    %37 = vmatpush.msra.mxu0 0.0
    %38 = vmatpush.msra.mxu0 0.0
    %39 = vmatpush.msra.mxu0 0.0
    %40 = vmatpush.msra.mxu0 0.0
    %41 = vmatpush.msra.mxu0 0.0
    %42 = vmatpush.msra.mxu0 0.0
    %43 = vmatpush.msra.mxu0 0.0
    %44 = vmatpush.msra.mxu0 0.0
    %45 = vmatpush.msra.mxu0 0.0
    %46 = vmatpush.msra.mxu0 %v23
    %47 = vmatpush.msra.mxu0 %v22
    %48 = vmatmul.f32.gmra.mxu0 %v30
    %v49 = vpop.f32.mrf.mxu0
    %v50 = vadd.f32 %v26, %v49
    %51 = vdwg.mxu0
    %v52 = vmax.f32 %v50, 0.0
    %v53 = vld [vmem:[%s3] sm:$0xff]
    %v54 = vld [vmem:[%s3 + $0x8] sm:$0xff]
    %v55 = vld [vmem:[%s3 + $0x10] sm:$0xff]
    %v56 = vld [vmem:[%s3 + $0x18] sm:$0xff]
    %v57 = vld [vmem:[%s3 + $0x20] sm:$0xff]
    %v58 = vld [vmem:[%s3 + $0x28] sm:$0xff]
    %v59 = vld [vmem:[%s3 + $0x30] sm:$0xff]
    %v60 = vld [vmem:[%s3 + $0x38] sm:$0xff]
    %v61 = vld [vmem:[%s3 + $0x40] sm:$0xff]
    %v62 = vld [vmem:[%s3 + $0x48] sm:$0xff]
    %v63 = vld [vmem:[%s3 + $0x50] sm:$0xff]
    %v64 = vld [vmem:[%s3 + $0x58] sm:$0xff]
    %v65 = vld [vmem:[%s3 + $0x60] sm:$0xff]
    %v66 = vld [vmem:[%s3 + $0x68] sm:$0xff]
    %v67 = vld [vmem:[%s3 + $0x70] sm:$0xff]
    %v68 = vld [vmem:[%s3 + $0x78] sm:$0xff]
    %v69 = vld [vmem:[%s4] sm:$0x1]
    %v71 = vperm.slane %v69, 0
    %73 = vmatpush.msra.mxu0 %v68
    %74 = vmatpush.msra.mxu0 %v67
    %75 = vmatpush.msra.mxu0 %v66
    %76 = vmatpush.msra.mxu0 %v65
    %77 = vmatpush.msra.mxu0 %v64
    %78 = vmatpush.msra.mxu0 %v63
    %79 = vmatpush.msra.mxu0 %v62
    %80 = vmatpush.msra.mxu0 %v61
    %81 = vmatpush.msra.mxu0 %v60
    %82 = vmatpush.msra.mxu0 %v59
    %83 = vmatpush.msra.mxu0 %v58
    %84 = vmatpush.msra.mxu0 %v57
    %85 = vmatpush.msra.mxu0 %v56
    %86 = vmatpush.msra.mxu0 %v55
    %87 = vmatpush.msra.mxu0 %v54
    %88 = vmatpush.msra.mxu0 %v53
    %89 = vmatmul.f32.gmra.mxu0 %v52
    %v90 = vpop.f32.mrf.mxu0
    %v91 = vadd.f32 %v71, %v90
    %92 = vdwg.mxu0
    %v93 = vlaneseq
    %v94 = vand.u32 %v93, 127
    %vm95 = vcmp.ge.s32.totalorder %v94, 4
    %v96 = vmax.f32 %v91, 0.0
    %v97 = vand.u32 2147483647, %v91
    %v98 = vsub.f32 0.0, %v97
    %v99 = vmul.f32 %v98, 1.442695
    %v100 = vpow.pop %v99
    %v101 = vadd.f32 %v100, 1.0
    %v102 = vlog2.pop %v101
    %v103 = vmul.f32 %v102, 0.6931472
    %v104 = vmul.f32 -0.5, %v100
    %v105 = vadd.f32 %v104, 1.0
    %v106 = vmul.f32 %v105, %v100
    %v107 = vand.u32 2147483647, %v100
    %vm108 = vcmp.lt.f32.partialorder %v107, 0.0004427343
    %v109 = vsel %vm108, %v106, %v103
    %v110 = vadd.f32 %v96, %v109
    %v111 = vadd.f32 %v110, 1e-06
    %v112 = vsel %vm95, %v111, %v91
    %vm113 = vcmask 64512
    %114 = vst.msk [vmem:[#allocation2] sm:$0xff] %vm113, %v112
    // Predicated region
    $region22: #{tpu_custom_call.1} parent=1 // pred_check
      _
    $region23: #{tpu_custom_call.1} parent=1 // pred_check_branch
      %116 = sbr.rel (0) target = $region25
    $region24: #{tpu_custom_call.1} parent=1 // pred_region
      %118 = vsyncadd [#allocation3], 0
      %s120 = sshll.u32 [#allocation2], 4
      %s121 = int_to_ptr.vmem [resolvable:$true] %s120
      %s122 = sshll.u32 %s5, 4
      %s123 = int_to_ptr.hbm [resolvable:$true] %s122
      %125 = dma.vmem_to_hbm [thread:$0]  %s121, 128, %s123, [#allocation3]
    $region25: #{tpu_custom_call.1} parent=1 // pred_fallthru
      _
    // Predicated region
    $region26: #{tpu_custom_call.1} parent=1 // pred_check
      _
    $region27: #{tpu_custom_call.1} parent=1 // pred_check_branch
      %127 = sbr.rel (0) target = $region29
    $region28: #{tpu_custom_call.1} parent=1 // pred_region
      %129 = dma.done [#allocation3], 128
    $region29: #{tpu_custom_call.1} parent=1 // pred_fallthru
      _
    %130 = vsyncpa [#allocation3], 1

</llo_original>
